<compile_context>
chip_gen: v7x
topology: tpu7x:2x2x1
jax: 0.10.0
libtpu: 0.0.40
codegen_flags: <defaults>
</compile_context>

<pallas_src>
import numpy as np
import jax
import jax.numpy as jnp
from jax.experimental import pallas as pl
from jax.experimental.pallas import tpu as pltpu


def _round_up(x, m):
    return ((x + m - 1) // m) * m


def _pad2(x, rows, cols):
    return jnp.pad(x, ((0, rows - x.shape[0]), (0, cols - x.shape[1])))


# --------------------------------------------------------------- GCN layer --
def _gcn_layer_kernel(apply_relu):
    def kernel(mask_ref, a_ref, h_ref, w_ref, b_ref, out_ref, acc_ref):
        i = pl.program_id(0)
        k = pl.program_id(1)

        @pl.when(k == 0)
        def _():
            acc_ref[...] = jnp.zeros_like(acc_ref)

        # Aggregation first (contract A_hat over the narrower input width):
        # acc[tm, C_in] += A[tm, tk] @ h[tk, C_in]  (bf16 inputs, f32 MXU acc).
        # Skip MXU work for all-zero adjacency blocks (k-NN graph is sparse).
        @pl.when(mask_ref[i, k] != 0)
        def _():
            acc_ref[...] += jnp.dot(a_ref[...], h_ref[...],
                                    preferred_element_type=jnp.float32)

        @pl.when(k == pl.num_programs(1) - 1)
        def _():
            # Feature transform + bias (+ ReLU) once per row tile, f32 math,
            # bf16 store (next consumer casts to bf16 for the MXU anyway).
            h_out = jnp.dot(acc_ref[...].astype(jnp.bfloat16), w_ref[...],
                            preferred_element_type=jnp.float32) + b_ref[...]
            if apply_relu:
                h_out = jnp.maximum(h_out, 0.0)
            out_ref[...] = h_out.astype(out_ref.dtype)

    return kernel


def gcn_layer(block_mask, a_bf16, h_bf16, w_bf16, b, *, apply_relu, tm, tk):
    n = a_bf16.shape[0]
    c_in = h_bf16.shape[1]
    c_out = w_bf16.shape[1]
    return pl.pallas_call(
        _gcn_layer_kernel(apply_relu),
        out_shape=jax.ShapeDtypeStruct((n, c_out), jnp.bfloat16),
        grid_spec=pltpu.PrefetchScalarGridSpec(
            num_scalar_prefetch=1,                       # block_mask -> SMEM
            grid=(n // tm, n // tk),
            in_specs=[
                pl.BlockSpec((tm, tk), lambda i, k, m: (i, k)),       # A_hat tile
                pl.BlockSpec((tk, c_in), lambda i, k, m: (k, 0)),     # h tile (bf16)
                pl.BlockSpec((c_in, c_out), lambda i, k, m: (0, 0)),  # W (resident)
                pl.BlockSpec((1, c_out), lambda i, k, m: (0, 0)),     # bias (resident)
            ],
            out_specs=pl.BlockSpec((tm, c_out), lambda i, k, m: (i, 0)),
            scratch_shapes=[pltpu.VMEM((tm, c_in), jnp.float32)],
        ),
        compiler_params=pltpu.CompilerParams(
            dimension_semantics=("parallel", "arbitrary")),
    )(block_mask, a_bf16, h_bf16, w_bf16, b)


# --------------------------------------------------- mean-pool + head Linear --
def _pool_head_kernel(p_ref, h_ref, wh_ref, bh_ref, out_ref, acc_ref):
    k = pl.program_id(0)

    @pl.when(k == 0)
    def _():
        acc_ref[...] = jnp.zeros_like(acc_ref)

    # Pool first: acc[G, C_hid] += P[G, tk] @ h[tk, C_hid]  (bf16 in, f32 acc).
    acc_ref[...] += jnp.dot(p_ref[...], h_ref[...],
                            preferred_element_type=jnp.float32)

    @pl.when(k == pl.num_programs(0) - 1)
    def _():
        # Head matmul + bias exactly once, after the reduction finishes.
        out_ref[...] = jnp.dot(acc_ref[...].astype(jnp.bfloat16), wh_ref[...],
                               preferred_element_type=jnp.float32) + bh_ref[...]


def pool_head(pool_bf16, h_bf16, wh_bf16, bh, *, tk):
    g_pad, n = pool_bf16.shape
    c_hid = h_bf16.shape[1]
    c_out = wh_bf16.shape[1]
    return pl.pallas_call(
        _pool_head_kernel,
        out_shape=jax.ShapeDtypeStruct((g_pad, c_out), jnp.float32),
        grid_spec=pltpu.PrefetchScalarGridSpec(
            num_scalar_prefetch=0,
            grid=(n // tk,),
            in_specs=[
                pl.BlockSpec((g_pad, tk), lambda k: (0, k)),     # pool tile
                pl.BlockSpec((tk, c_hid), lambda k: (k, 0)),     # h tile (bf16)
                pl.BlockSpec((c_hid, c_out), lambda k: (0, 0)),  # W_head (resident)
                pl.BlockSpec((1, c_out), lambda k: (0, 0)),      # b_head (resident)
            ],
            out_specs=pl.BlockSpec((g_pad, c_out), lambda k: (0, 0)),
            scratch_shapes=[pltpu.VMEM((g_pad, c_hid), jnp.float32)],
        ),
        compiler_params=pltpu.CompilerParams(
            dimension_semantics=("arbitrary",)),
    )(pool_bf16, h_bf16, wh_bf16, bh)


# ---------------------------------------------------------------- wrapper --
def builtin_gnn_forward(a_hat, x, layer_params, pool, w_head, b_head, *, tile=512):
    n = x.shape[0]
    g = pool.shape[0]
    out_dim = w_head.shape[1]

    # Tile choice: target 512 (sweep 256-1024 at scale; cap ~1024 on v7x's
    # 64 MiB VMEM), clamped so tiny graphs don't over-pad.  tm == tk keeps a
    # single n_pad valid for both grid axes.  At scale prefer n_pad/tm >= 2 so
    # both v7x TensorCores get row tiles under the "parallel" axis.
    tm = tk = min(tile, _round_up(n, 128))
    n_pad = _round_up(n, tm)
    g_pad = _round_up(g, 8)

    a_f32 = _pad2(jnp.asarray(a_hat, jnp.float32), n_pad, n_pad)
    a_p = a_f32.astype(jnp.bfloat16)
    pool_p = _pad2(jnp.asarray(pool, jnp.float32), g_pad, n_pad).astype(jnp.bfloat16)

    # Per-(row-tile, k-tile) nonzero block mask of A_hat (scalar-prefetched).
    nb_i, nb_k = n_pad // tm, n_pad // tk
    block_mask = (jnp.sum(jnp.abs(a_f32).reshape(nb_i, tm, nb_k, tk),
                          axis=(1, 3)) > 0).astype(jnp.int32)

    # Activations stream between layers as bf16.
    h = _pad2(jnp.asarray(x, jnp.float32), n_pad,
              _round_up(x.shape[1], 128)).astype(jnp.bfloat16)

    num_layers = len(layer_params)
    for l, (w, b) in enumerate(layer_params):
        c_in_p = _round_up(w.shape[0], 128)
        c_out_p = _round_up(w.shape[1], 128)
        w_p = _pad2(jnp.asarray(w, jnp.float32), c_in_p, c_out_p).astype(jnp.bfloat16)
        b_p = _pad2(jnp.asarray(b, jnp.float32), 1, c_out_p)
        h = gcn_layer(block_mask, a_p, h, w_p, b_p,
                      apply_relu=(l < num_layers - 1), tm=tm, tk=tk)

    wh_p = _pad2(jnp.asarray(w_head, jnp.float32),
                 _round_up(w_head.shape[0], 128),
                 _round_up(out_dim, 128)).astype(jnp.bfloat16)
    bh_p = _pad2(jnp.asarray(b_head, jnp.float32), 1, _round_up(out_dim, 128))

    out_p = pool_head(pool_p, h, wh_p, bh_p, tk=tk)
    return out_p[:g, :out_dim]


# --------------------------------------------------------- host-side glue --
def build_knn_graph(x_np, k):
    """Symmetric k-NN edges from features (plain numpy glue)."""
    n = x_np.shape[0]
    d2 = ((x_np[:, None, :] - x_np[None, :, :]) ** 2).sum(-1)
    np.fill_diagonal(d2, np.inf)
    nbrs = np.argsort(d2, axis=1)[:, :k]
    adj = np.zeros((n, n), dtype=np.float32)
    for i in range(n):
        for j in nbrs[i]:
            adj[i, j] = 1.0
            adj[j, i] = 1.0
    return adj


def normalize_adj(adj):
    """A_hat = D^-1/2 (A + I) D^-1/2 (GCNConv normalization with self-loops)."""
    n = adj.shape[0]
    a = adj + np.eye(n, dtype=np.float32)
    deg = a.sum(axis=1)
    d_inv_sqrt = 1.0 / np.sqrt(deg)
    return (d_inv_sqrt[:, None] * a * d_inv_sqrt[None, :]).astype(np.float32)


def build_pool_matrix(batch, num_graphs):
    n = batch.shape[0]
    pool = np.zeros((num_graphs, n), dtype=np.float32)
    for g in range(num_graphs):
        idx = np.where(batch == g)[0]
        pool[g, idx] = 1.0 / max(len(idx), 1)   # guard empty graph id
    return pool


if __name__ == "__main__":
    # Small problem consistent with the module:
    N = 16                 # nodes
    IN_CH = 8              # in_channels
    HIDDEN = 32            # hidden_channels
    NUM_LAYERS = 2
    OUT_CH = 4             # out_channels (head)
    K = 4                  # k-NN
    NUM_GRAPHS = 2

    key = jax.random.PRNGKey(0)
    keys = jax.random.split(key, 3 + 2 * NUM_LAYERS)

    # data.x, data.batch
    x = jax.random.normal(keys[0], (N, IN_CH), dtype=jnp.float32)
    batch = np.repeat(np.arange(NUM_GRAPHS), N // NUM_GRAPHS)

    # graph structure (glue, plain numpy/JAX)
    x_np = np.asarray(x)
    a_hat = jnp.asarray(normalize_adj(build_knn_graph(x_np, K)))
    pool = jnp.asarray(build_pool_matrix(batch, NUM_GRAPHS))

    # deterministic parameter init (glorot-ish)
    layer_params = []
    fan_in = IN_CH
    for l in range(NUM_LAYERS):
        w = jax.random.normal(keys[1 + l], (fan_in, HIDDEN), jnp.float32) / np.sqrt(fan_in)
        b = jnp.zeros((1, HIDDEN), jnp.float32)
        layer_params.append((w, b))
        fan_in = HIDDEN
    w_head = jax.random.normal(keys[1 + NUM_LAYERS], (HIDDEN, OUT_CH), jnp.float32) / np.sqrt(HIDDEN)
    b_head = jax.random.normal(keys[2 + NUM_LAYERS], (1, OUT_CH), jnp.float32) * 0.01

    # run Pallas kernels
    out = builtin_gnn_forward(a_hat, x, layer_params, pool, w_head, b_head)
    out = jax.block_until_ready(out)

    # pure-JAX reference mirroring the kernel numerics
    # (bf16 MXU inputs, f32 accumulation, bf16 activation stream between layers)
    a_b = a_hat.astype(jnp.bfloat16)
    p_b = pool.astype(jnp.bfloat16)
    h = x.astype(jnp.bfloat16)
    for l, (w, b) in enumerate(layer_params):
        agg = jnp.dot(a_b, h, preferred_element_type=jnp.float32)
        h_f32 = jnp.dot(agg.astype(jnp.bfloat16), w.astype(jnp.bfloat16),
                        preferred_element_type=jnp.float32) + b
        if l < NUM_LAYERS - 1:
            h_f32 = jnp.maximum(h_f32, 0.0)
        h = h_f32.astype(jnp.bfloat16)
    pooled = jnp.dot(p_b, h, preferred_element_type=jnp.float32)
    ref = jnp.dot(pooled.astype(jnp.bfloat16), w_head.astype(jnp.bfloat16),
                  preferred_element_type=jnp.float32) + b_head

    assert out.shape == (NUM_GRAPHS, OUT_CH)
    assert np.allclose(np.asarray(out), np.asarray(ref), atol=1e-2, rtol=1e-2)
    print("KERNEL_OK")
</pallas_src>

<mosaic_0001>
module attributes {stable_mosaic.version = 11 : i64} {
  func.func @kernel(%arg0: i32, %arg1: i32, %arg2: memref<1x1xi32, #tpu.memory_space<smem>>, %arg3: memref<128x128xbf16, #tpu.memory_space<vmem>>, %arg4: memref<128x128xbf16, #tpu.memory_space<vmem>>, %arg5: memref<128x128xbf16, #tpu.memory_space<vmem>>, %arg6: memref<1x128xf32, #tpu.memory_space<vmem>>, %arg7: memref<128x128xbf16, #tpu.memory_space<vmem>>, %arg8: memref<128x128xf32, #tpu.memory_space<vmem>>) attributes {dimension_semantics = [#tpu.dimension_semantics<parallel>, #tpu.dimension_semantics<arbitrary>], iteration_bounds = array<i64: 1, 1>, scalar_prefetch = 1 : i64, scratch_operands = 1 : i64, tpu.core_type = #tpu.core_type<tc>, window_params = [{transform_indices = @transform_0, window_bounds = array<i64: 128, 128>}, {transform_indices = @transform_1, window_bounds = array<i64: 128, 128>}, {pipeline_mode = #tpu.pipeline_mode<synchronous>, transform_indices = @transform_2, window_bounds = array<i64: 128, 128>}, {pipeline_mode = #tpu.pipeline_mode<synchronous>, transform_indices = @transform_3, window_bounds = array<i64: 1, 128>}, {transform_indices = @transform_4, window_bounds = array<i64: 128, 128>}]} {
    %c0_i32 = arith.constant 0 : i32
    %0 = arith.cmpi eq, %arg1, %c0_i32 : i32
    %1 = arith.extui %0 : i1 to i32
    %c0_i32_0 = arith.constant 0 : i32
    %2 = arith.cmpi ne, %1, %c0_i32_0 : i32
    scf.if %2 {
      %cst = arith.constant 0.000000e+00 : f32
      %12 = vector.broadcast %cst : f32 to vector<128x128xf32>
      %c0 = arith.constant 0 : index
      %c0_5 = arith.constant 0 : index
      %13 = vector.load %arg8[%c0, %c0_5] : memref<128x128xf32, #tpu.memory_space<vmem>>, vector<128x128xf32>
      tpu.vector_store %arg8[%c0, %c0_5], %12 {strides = array<i32>} : memref<128x128xf32, #tpu.memory_space<vmem>>, vector<128x128xf32>,
    } else {
    }
    %3 = arith.index_cast %arg0 : i32 to index
    %4 = arith.index_cast %arg1 : i32 to index
    %5 = memref.load %arg2[%3, %4] : memref<1x1xi32, #tpu.memory_space<smem>>
    %c0_i32_1 = arith.constant 0 : i32
    %6 = arith.cmpi ne, %5, %c0_i32_1 : i32
    %7 = arith.extui %6 : i1 to i32
    %c0_i32_2 = arith.constant 0 : i32
    %8 = arith.cmpi ne, %7, %c0_i32_2 : i32
    scf.if %8 {
      %c0 = arith.constant 0 : index
      %c0_5 = arith.constant 0 : index
      %12 = vector.load %arg8[%c0, %c0_5] : memref<128x128xf32, #tpu.memory_space<vmem>>, vector<128x128xf32>
      %c0_6 = arith.constant 0 : index
      %c0_7 = arith.constant 0 : index
      %13 = vector.load %arg3[%c0_6, %c0_7] : memref<128x128xbf16, #tpu.memory_space<vmem>>, vector<128x128xbf16>
      %c0_8 = arith.constant 0 : index
      %c0_9 = arith.constant 0 : index
      %14 = vector.load %arg4[%c0_8, %c0_9] : memref<128x128xbf16, #tpu.memory_space<vmem>>, vector<128x128xbf16>
      %cst = arith.constant dense<0.000000e+00> : vector<128x128xf32>
      %15 = tpu.matmul %13, %14, %cst {dimension_numbers = #tpu.dot_dimension_numbers<[1], [0], [0], [1], [0, 0, 1, 1], [], []>} : vector<128x128xbf16>, vector<128x128xbf16>, vector<128x128xf32> -> vector<128x128xf32>
      %16 = arith.addf %12, %15 : vector<128x128xf32>
      %c0_10 = arith.constant 0 : index
      %c0_11 = arith.constant 0 : index
      %17 = vector.load %arg8[%c0_10, %c0_11] : memref<128x128xf32, #tpu.memory_space<vmem>>, vector<128x128xf32>
      tpu.vector_store %arg8[%c0_10, %c0_11], %16 {strides = array<i32>} : memref<128x128xf32, #tpu.memory_space<vmem>>, vector<128x128xf32>,
    } else {
    }
    %c0_i32_3 = arith.constant 0 : i32
    %9 = arith.cmpi eq, %arg1, %c0_i32_3 : i32
    %10 = arith.extui %9 : i1 to i32
    %c0_i32_4 = arith.constant 0 : i32
    %11 = arith.cmpi ne, %10, %c0_i32_4 : i32
    scf.if %11 {
      %c0 = arith.constant 0 : index
      %c0_5 = arith.constant 0 : index
      %12 = vector.load %arg8[%c0, %c0_5] : memref<128x128xf32, #tpu.memory_space<vmem>>, vector<128x128xf32>
      %13 = arith.truncf %12 : vector<128x128xf32> to vector<128x128xbf16>
      %c0_6 = arith.constant 0 : index
      %c0_7 = arith.constant 0 : index
      %14 = vector.load %arg5[%c0_6, %c0_7] : memref<128x128xbf16, #tpu.memory_space<vmem>>, vector<128x128xbf16>
      %cst = arith.constant dense<0.000000e+00> : vector<128x128xf32>
      %15 = tpu.matmul %13, %14, %cst {dimension_numbers = #tpu.dot_dimension_numbers<[1], [0], [0], [1], [0, 0, 1, 1], [], []>} : vector<128x128xbf16>, vector<128x128xbf16>, vector<128x128xf32> -> vector<128x128xf32>
      %c0_8 = arith.constant 0 : index
      %c0_9 = arith.constant 0 : index
      %16 = vector.load %arg6[%c0_8, %c0_9] : memref<1x128xf32, #tpu.memory_space<vmem>>, vector<1x128xf32>
      %17 = vector.broadcast %16 : vector<1x128xf32> to vector<128x128xf32>
      %18 = arith.addf %15, %17 : vector<128x128xf32>
      %cst_10 = arith.constant 0.000000e+00 : f32
      %19 = vector.broadcast %cst_10 : f32 to vector<128x128xf32>
      %20 = arith.maximumf %18, %19 : vector<128x128xf32>
      %21 = arith.truncf %20 : vector<128x128xf32> to vector<128x128xbf16>
      %c0_11 = arith.constant 0 : index
      %c0_12 = arith.constant 0 : index
      %22 = vector.load %arg7[%c0_11, %c0_12] : memref<128x128xbf16, #tpu.memory_space<vmem>>, vector<128x128xbf16>
      tpu.vector_store %arg7[%c0_11, %c0_12], %21 {strides = array<i32>} : memref<128x128xbf16, #tpu.memory_space<vmem>>, vector<128x128xbf16>,
    } else {
    }
    return
  }
  func.func @transform_0(%arg0: i32, %arg1: i32, %arg2: memref<1x1xi32, #tpu.memory_space<smem>>) -> (i32, i32) {
    %c0_i32 = arith.constant 0 : i32
    return %arg0, %arg1 : i32, i32
  }
  func.func @transform_1(%arg0: i32, %arg1: i32, %arg2: memref<1x1xi32, #tpu.memory_space<smem>>) -> (i32, i32) {
    %c0_i32 = arith.constant 0 : i32
    %c0_i32_0 = arith.constant 0 : i32
    return %arg1, %c0_i32 : i32, i32
  }
  func.func @transform_2(%arg0: i32, %arg1: i32, %arg2: memref<1x1xi32, #tpu.memory_space<smem>>) -> (i32, i32) {
    %c0_i32 = arith.constant 0 : i32
    %c0_i32_0 = arith.constant 0 : i32
    %c0_i32_1 = arith.constant 0 : i32
    return %c0_i32, %c0_i32_0 : i32, i32
  }
  func.func @transform_3(%arg0: i32, %arg1: i32, %arg2: memref<1x1xi32, #tpu.memory_space<smem>>) -> (i32, i32) {
    %c0_i32 = arith.constant 0 : i32
    %c0_i32_0 = arith.constant 0 : i32
    %c0_i32_1 = arith.constant 0 : i32
    return %c0_i32, %c0_i32_0 : i32, i32
  }
  func.func @transform_4(%arg0: i32, %arg1: i32, %arg2: memref<1x1xi32, #tpu.memory_space<smem>>) -> (i32, i32) {
    %c0_i32 = arith.constant 0 : i32
    %c0_i32_0 = arith.constant 0 : i32
    return %arg0, %c0_i32 : i32, i32
  }
}

</mosaic_0001>

<llo_original>
// kernel: tpu_custom_call.1
$region0: #{tpu_custom_call.1}
  #allocation0 [shape = 'u32[]', space=smem, size = 0x4, offset = 0x4, fixed_abs, tag = 'smem constant byte address 0x4 - core index']
  #allocation1 [shape = 'u32[144,128]{1,0:T(1,128)}', space=vmem, size = 0x12000, scoped, tag = 'internal scratch']
  #allocation2 [shape = 'f32[128,128]{1,0:T(8,128)}', space=vmem, size = 0x10000, scoped, tag = 'scratch operand']
  #allocation3 [shape = 's32[1]{0}', space=sflag, size = 0x4, scoped, tag = 'scoped memory for tpu_custom_call.1']
  #allocation4 [shape = 's32[1,1]{1,0:T(1,128)S(6)}', space=smem, size = 0x200, scoped, tag = 'prefetched SMEM operand 0']
  %s0 = inlined_call_operand.<no memory space> [shape: s32[1,1], index: 0, kind: input, shape index: {}]
  %s1 = inlined_call_operand.hbm [shape: bf16[128,128], index: 1, kind: input, shape index: {}]
  %s2 = inlined_call_operand.hbm [shape: bf16[128,128], index: 2, kind: input, shape index: {}]
  %s3 = inlined_call_operand.hbm [shape: bf16[128,128], index: 3, kind: input, shape index: {}]
  %s4 = inlined_call_operand.vmem [shape: f32[1,128], index: 4, kind: input, shape index: {}]
  %s5 = inlined_call_operand.hbm [shape: bf16[128,128], index: 5, kind: output, shape index: {}]
  %s6 = sld [smem:[#allocation0]]
  $region50: #{tpu_custom_call.1} parent=0
    _
  %s8 = ssub.s32 1, %s6
  %s9 = scalar_select 0, %s8, %s6
  %10 = sst [smem:[#allocation4]] %s0
  $region1: #{tpu_custom_call.1} parent=0
    #allocation5 [shape = 'u8[32768]{0}', space=vmem, size = 0x8000, scoped, tag = 'input window, operand 1, single buffered']
    #allocation6 [shape = 's32[1]{0}', space=sflag, size = 0x4, scoped, tag = 'scoped memory for tpu_custom_call.1']
    #allocation7 [shape = 's32[1]{0}', space=sflag, size = 0x4, scoped, tag = 'scoped memory for tpu_custom_call.1']
    #allocation8 [shape = 'u8[32768]{0}', space=vmem, size = 0x8000, scoped, tag = 'input window, operand 2, single buffered']
    #allocation9 [shape = 's32[1]{0}', space=sflag, size = 0x4, scoped, tag = 'scoped memory for tpu_custom_call.1']
    #allocation10 [shape = 'u8[32768]{0}', space=vmem, size = 0x8000, scoped, tag = 'input window, operand 3, single buffered']
    #allocation11 [shape = 'u8[32768]{0}', space=vmem, size = 0x8000, scoped, tag = 'output window, operand 0, single buffered']
    %11 = vsyncpa [#allocation6], 0
    %12 = vsyncpa [#allocation9], 0
    %13 = vsyncpa [#allocation7], 0
    // Predicated region
    $region2: #{tpu_custom_call.1} parent=1 // pred_check
      _
    $region3: #{tpu_custom_call.1} parent=1 // pred_check_branch
      %15 = sbr.rel (0) target = $region5
    $region4: #{tpu_custom_call.1} parent=1 // pred_region
      %s17 = ssub.s32 1024, 1024
      %18 = vsyncadd [#allocation6], %s17
      %s19 = sshll.u32 [#allocation5], 4
      %s20 = int_to_ptr.vmem [resolvable:$true] %s19
      %25 = dma.hbm_to_vmem [thread:$0]  %s1, 1024, %s20, [#allocation6], 64, 64, 4
    $region5: #{tpu_custom_call.1} parent=1 // pred_fallthru
      _
    // Predicated region
    $region6: #{tpu_custom_call.1} parent=1 // pred_check
      _
    $region7: #{tpu_custom_call.1} parent=1 // pred_check_branch
      %27 = sbr.rel (0) target = $region9
    $region8: #{tpu_custom_call.1} parent=1 // pred_region
      %s29 = ssub.s32 1024, 1024
      %30 = vsyncadd [#allocation9], %s29
      %s31 = sshll.u32 [#allocation8], 4
      %s32 = int_to_ptr.vmem [resolvable:$true] %s31
      %37 = dma.hbm_to_vmem [thread:$0]  %s2, 1024, %s32, [#allocation9], 64, 64, 4
    $region9: #{tpu_custom_call.1} parent=1 // pred_fallthru
      _
    // Predicated region
    $region10: #{tpu_custom_call.1} parent=1 // pred_check
      _
    $region11: #{tpu_custom_call.1} parent=1 // pred_check_branch
      %39 = sbr.rel (0) target = $region13
    $region12: #{tpu_custom_call.1} parent=1 // pred_region
      %s41 = ssub.s32 1024, 1024
      %42 = vsyncadd [#allocation9], %s41
      %s43 = sshll.u32 [#allocation10], 4
      %s44 = int_to_ptr.vmem [resolvable:$true] %s43
      %49 = dma.hbm_to_vmem [thread:$0]  %s3, 1024, %s44, [#allocation9], 64, 64, 4
    $region13: #{tpu_custom_call.1} parent=1 // pred_fallthru
      _
    // Predicated region
    $region14: #{tpu_custom_call.1} parent=1 // pred_check
      _
    $region15: #{tpu_custom_call.1} parent=1 // pred_check_branch
      %51 = sbr.rel (0) target = $region17
    $region16: #{tpu_custom_call.1} parent=1 // pred_region
      _
    $region17: #{tpu_custom_call.1} parent=1 // pred_fallthru
      _
    // Predicated region
    $region18: #{tpu_custom_call.1} parent=1 // pred_check
      _
    $region19: #{tpu_custom_call.1} parent=1 // pred_check_branch
      %53 = sbr.rel (0) target = $region21
    $region20: #{tpu_custom_call.1} parent=1 // pred_region
      %54 = dma.done [#allocation6], 1024
    $region21: #{tpu_custom_call.1} parent=1 // pred_fallthru
      _
    // Predicated region
    $region22: #{tpu_custom_call.1} parent=1 // pred_check
      _
    $region23: #{tpu_custom_call.1} parent=1 // pred_check_branch
      %56 = sbr.rel (0) target = $region25
    $region24: #{tpu_custom_call.1} parent=1 // pred_region
      %57 = dma.done [#allocation9], 1024
    $region25: #{tpu_custom_call.1} parent=1 // pred_fallthru
      _
    // Predicated region
    $region26: #{tpu_custom_call.1} parent=1 // pred_check
      _
    $region27: #{tpu_custom_call.1} parent=1 // pred_check_branch
      %59 = sbr.rel (0) target = $region29
    $region28: #{tpu_custom_call.1} parent=1 // pred_region
      %60 = dma.done [#allocation9], 1024
    $region29: #{tpu_custom_call.1} parent=1 // pred_fallthru
      _
    %p62 = scmp.eq.s32.totalorder 0, 0
    // Predicated region
    $region30: #{tpu_custom_call.1} parent=1 // pred_check
      %p63 = pneg %p62
    $region31: #{tpu_custom_call.1} parent=1 // pred_check_branch
      %65 = sbr.rel (%p63) target = $region33
    $region32: #{tpu_custom_call.1} parent=1 // pred_region
      %66 = vst [vmem:[#allocation2] sm:$0xff] 0.0
      %67 = vst [vmem:[#allocation2 + $0x8] sm:$0xff] 0.0
      %68 = vst [vmem:[#allocation2 + $0x10] sm:$0xff] 0.0
      %69 = vst [vmem:[#allocation2 + $0x18] sm:$0xff] 0.0
      %70 = vst [vmem:[#allocation2 + $0x20] sm:$0xff] 0.0
      %71 = vst [vmem:[#allocation2 + $0x28] sm:$0xff] 0.0
      %72 = vst [vmem:[#allocation2 + $0x30] sm:$0xff] 0.0
      %73 = vst [vmem:[#allocation2 + $0x38] sm:$0xff] 0.0
      %74 = vst [vmem:[#allocation2 + $0x40] sm:$0xff] 0.0
      %75 = vst [vmem:[#allocation2 + $0x48] sm:$0xff] 0.0
      %76 = vst [vmem:[#allocation2 + $0x50] sm:$0xff] 0.0
      %77 = vst [vmem:[#allocation2 + $0x58] sm:$0xff] 0.0
      %78 = vst [vmem:[#allocation2 + $0x60] sm:$0xff] 0.0
      %79 = vst [vmem:[#allocation2 + $0x68] sm:$0xff] 0.0
      %80 = vst [vmem:[#allocation2 + $0x70] sm:$0xff] 0.0
      %81 = vst [vmem:[#allocation2 + $0x78] sm:$0xff] 0.0
    $region33: #{tpu_custom_call.1} parent=1 // pred_fallthru
      _
    %s82 = sadd.s32 0, 0
    %s83 = smul.u32 %s82, 128
    %s84 = sadd.s32 %s83, 0
    %s85 = sld [smem:[#allocation4 + %s84]]
    %p86 = scmp.ne.s32.totalorder %s85, 0
    // Predicated region
    $region34: #{tpu_custom_call.1} parent=1 // pred_check
      %p87 = pneg %p86
    $region35: #{tpu_custom_call.1} parent=1 // pred_check_branch
      %89 = sbr.rel (%p87) target = $region37
    $region36: #{tpu_custom_call.1} parent=1 // pred_region
      %v90 = vld [vmem:[#allocation2] sm:$0xff]
      %v91 = vld [vmem:[#allocation2 + $0x8] sm:$0xff]
      %v92 = vld [vmem:[#allocation2 + $0x10] sm:$0xff]
      %v93 = vld [vmem:[#allocation2 + $0x18] sm:$0xff]
      %v94 = vld [vmem:[#allocation2 + $0x20] sm:$0xff]
      %v95 = vld [vmem:[#allocation2 + $0x28] sm:$0xff]
      %v96 = vld [vmem:[#allocation2 + $0x30] sm:$0xff]
      %v97 = vld [vmem:[#allocation2 + $0x38] sm:$0xff]
      %v98 = vld [vmem:[#allocation2 + $0x40] sm:$0xff]
      %v99 = vld [vmem:[#allocation2 + $0x48] sm:$0xff]
      %v100 = vld [vmem:[#allocation2 + $0x50] sm:$0xff]
      %v101 = vld [vmem:[#allocation2 + $0x58] sm:$0xff]
      %v102 = vld [vmem:[#allocation2 + $0x60] sm:$0xff]
      %v103 = vld [vmem:[#allocation2 + $0x68] sm:$0xff]
      %v104 = vld [vmem:[#allocation2 + $0x70] sm:$0xff]
      %v105 = vld [vmem:[#allocation2 + $0x78] sm:$0xff]
      %v106 = vld [vmem:[#allocation5] sm:$0xf]
      %v107 = vld [vmem:[#allocation5 + $0x4] sm:$0xf]
      %v108 = vld [vmem:[#allocation5 + $0x8] sm:$0xf]
      %v109 = vld [vmem:[#allocation5 + $0xc] sm:$0xf]
      %v110 = vld [vmem:[#allocation5 + $0x10] sm:$0xf]
      %v111 = vld [vmem:[#allocation5 + $0x14] sm:$0xf]
      %v112 = vld [vmem:[#allocation5 + $0x18] sm:$0xf]
      %v113 = vld [vmem:[#allocation5 + $0x1c] sm:$0xf]
      %v114 = vld [vmem:[#allocation5 + $0x20] sm:$0xf]
      %v115 = vld [vmem:[#allocation5 + $0x24] sm:$0xf]
      %v116 = vld [vmem:[#allocation5 + $0x28] sm:$0xf]
      %v117 = vld [vmem:[#allocation5 + $0x2c] sm:$0xf]
      %v118 = vld [vmem:[#allocation5 + $0x30] sm:$0xf]
      %v119 = vld [vmem:[#allocation5 + $0x34] sm:$0xf]
      %v120 = vld [vmem:[#allocation5 + $0x38] sm:$0xf]
      %v121 = vld [vmem:[#allocation5 + $0x3c] sm:$0xf]
      %v122 = vld [vmem:[#allocation8] sm:$0xf]
      %v123 = vld [vmem:[#allocation8 + $0x4] sm:$0xf]
      %v124 = vld [vmem:[#allocation8 + $0x8] sm:$0xf]
      %v125 = vld [vmem:[#allocation8 + $0xc] sm:$0xf]
      %v126 = vld [vmem:[#allocation8 + $0x10] sm:$0xf]
      %v127 = vld [vmem:[#allocation8 + $0x14] sm:$0xf]
      %v128 = vld [vmem:[#allocation8 + $0x18] sm:$0xf]
      %v129 = vld [vmem:[#allocation8 + $0x1c] sm:$0xf]
      %v130 = vld [vmem:[#allocation8 + $0x20] sm:$0xf]
      %v131 = vld [vmem:[#allocation8 + $0x24] sm:$0xf]
      %v132 = vld [vmem:[#allocation8 + $0x28] sm:$0xf]
      %v133 = vld [vmem:[#allocation8 + $0x2c] sm:$0xf]
      %v134 = vld [vmem:[#allocation8 + $0x30] sm:$0xf]
      %v135 = vld [vmem:[#allocation8 + $0x34] sm:$0xf]
      %v136 = vld [vmem:[#allocation8 + $0x38] sm:$0xf]
      %v137 = vld [vmem:[#allocation8 + $0x3c] sm:$0xf]
      %v154 = vunpack.c.l.b16 %v106
      %v155 = vunpack.c.l.b16 %v107
      %v156 = vunpack.c.l.b16 %v108
      %v157 = vunpack.c.l.b16 %v109
      %v158 = vunpack.c.l.b16 %v110
      %v159 = vunpack.c.l.b16 %v111
      %v160 = vunpack.c.l.b16 %v112
      %v161 = vunpack.c.l.b16 %v113
      %v162 = vunpack.c.l.b16 %v114
      %v163 = vunpack.c.l.b16 %v115
      %v164 = vunpack.c.l.b16 %v116
      %v165 = vunpack.c.l.b16 %v117
      %v166 = vunpack.c.l.b16 %v118
      %v167 = vunpack.c.l.b16 %v119
      %v168 = vunpack.c.l.b16 %v120
      %v169 = vunpack.c.l.b16 %v121
      %v170 = vpack.c.b16 %v155, %v154
      %v171 = vpack.c.b16 %v157, %v156
      %v172 = vpack.c.b16 %v159, %v158
      %v173 = vpack.c.b16 %v161, %v160
      %v174 = vpack.c.b16 %v163, %v162
      %v175 = vpack.c.b16 %v165, %v164
      %v176 = vpack.c.b16 %v167, %v166
      %v177 = vpack.c.b16 %v169, %v168
      %v202 = vunpack.c.l.b16 %v122
      %v203 = vunpack.c.l.b16 %v123
      %v204 = vunpack.c.l.b16 %v124
      %v205 = vunpack.c.l.b16 %v125
      %v206 = vunpack.c.l.b16 %v126
      %v207 = vunpack.c.l.b16 %v127
      %v208 = vunpack.c.l.b16 %v128
      %v209 = vunpack.c.l.b16 %v129
      %v210 = vunpack.c.l.b16 %v130
      %v211 = vunpack.c.l.b16 %v131
      %v212 = vunpack.c.l.b16 %v132
      %v213 = vunpack.c.l.b16 %v133
      %v214 = vunpack.c.l.b16 %v134
      %v215 = vunpack.c.l.b16 %v135
      %v216 = vunpack.c.l.b16 %v136
      %v217 = vunpack.c.l.b16 %v137
      %v218 = vpack.c.b16 %v203, %v202
      %v219 = vpack.c.b16 %v205, %v204
      %v220 = vpack.c.b16 %v207, %v206
      %v221 = vpack.c.b16 %v209, %v208
      %v222 = vpack.c.b16 %v211, %v210
      %v223 = vpack.c.b16 %v213, %v212
      %v224 = vpack.c.b16 %v215, %v214
      %v225 = vpack.c.b16 %v217, %v216
      %234 = vmatprep.subr.bf16.mxu0 0
      %235 = vmatpush1.bf16.msra.mxu0 %v218
      %236 = vmatprep.subr.bf16.mxu0 0
      %237 = vmatpush1.bf16.msra.mxu0 %v219
      %238 = vmatprep.subr.bf16.mxu0 0
      %239 = vmatpush1.bf16.msra.mxu0 %v220
      %240 = vmatprep.subr.bf16.mxu0 0
      %241 = vmatpush1.bf16.msra.mxu0 %v221
      %242 = vmatprep.subr.bf16.mxu0 0
      %243 = vmatpush1.bf16.msra.mxu0 %v222
      %244 = vmatprep.subr.bf16.mxu0 0
      %245 = vmatpush1.bf16.msra.mxu0 %v223
      %246 = vmatprep.subr.bf16.mxu0 0
      %247 = vmatpush1.bf16.msra.mxu0 %v224
      %248 = vmatprep.subr.bf16.mxu0 0
      %249 = vmatpush1.bf16.msra.mxu0 %v225
      %250 = vmatprep.subr.bf16.mxu0 0
      %251 = vmatpush1.bf16.msra.mxu0 0
      %252 = vmatprep.subr.bf16.mxu0 0
      %253 = vmatpush1.bf16.msra.mxu0 0
      %254 = vmatprep.subr.bf16.mxu0 0
      %255 = vmatpush1.bf16.msra.mxu0 0
      %256 = vmatprep.subr.bf16.mxu0 0
      %257 = vmatpush1.bf16.msra.mxu0 0
      %258 = vmatprep.subr.bf16.mxu0 0
      %259 = vmatpush1.bf16.msra.mxu0 0
      %260 = vmatprep.subr.bf16.mxu0 0
      %261 = vmatpush1.bf16.msra.mxu0 0
      %262 = vmatprep.subr.bf16.mxu0 0
      %263 = vmatpush1.bf16.msra.mxu0 0
      %264 = vmatprep.subr.bf16.mxu0 0
      %265 = vmatpush1.bf16.msra.mxu0 0
      %266 = vmatprep.mubr.bf16.mxu0 0
      %267 = vmatmul.mubr.bf16.gmra.mrb[0].mxu0 %v170
      %v268 = vpop.f32.mrb[0].mxu0
      %v269 = vadd.f32 0.0, %v268
      %v270 = vpop.f32.mrb[0].mxu0
      %v271 = vpop.f32.mrb[0].mxu0
      %v272 = vadd.f32 0.0, %v271
      %v273 = vpop.f32.mrb[0].mxu0
      %274 = vmatprep.mubr.bf16.mxu0 0
      %275 = vmatmul.mubr.bf16.gmra.mrb[0].mxu0 %v171
      %v276 = vpop.f32.mrb[0].mxu0
      %v277 = vadd.f32 0.0, %v276
      %v278 = vpop.f32.mrb[0].mxu0
      %v279 = vpop.f32.mrb[0].mxu0
      %v280 = vadd.f32 0.0, %v279
      %v281 = vpop.f32.mrb[0].mxu0
      %282 = vmatprep.mubr.bf16.mxu0 0
      %283 = vmatmul.mubr.bf16.gmra.mrb[0].mxu0 %v172
      %v284 = vpop.f32.mrb[0].mxu0
      %v285 = vadd.f32 0.0, %v284
      %v286 = vpop.f32.mrb[0].mxu0
      %v287 = vpop.f32.mrb[0].mxu0
      %v288 = vadd.f32 0.0, %v287
      %v289 = vpop.f32.mrb[0].mxu0
      %290 = vmatprep.mubr.bf16.mxu0 0
      %291 = vmatmul.mubr.bf16.gmra.mrb[0].mxu0 %v173
      %v292 = vpop.f32.mrb[0].mxu0
      %v293 = vadd.f32 0.0, %v292
      %v294 = vpop.f32.mrb[0].mxu0
      %v295 = vpop.f32.mrb[0].mxu0
      %v296 = vadd.f32 0.0, %v295
      %v297 = vpop.f32.mrb[0].mxu0
      %298 = vmatprep.mubr.bf16.mxu0 0
      %299 = vmatmul.mubr.bf16.gmra.mrb[0].mxu0 %v174
      %v300 = vpop.f32.mrb[0].mxu0
      %v301 = vadd.f32 0.0, %v300
      %v302 = vpop.f32.mrb[0].mxu0
      %v303 = vpop.f32.mrb[0].mxu0
      %v304 = vadd.f32 0.0, %v303
      %v305 = vpop.f32.mrb[0].mxu0
      %306 = vmatprep.mubr.bf16.mxu0 0
      %307 = vmatmul.mubr.bf16.gmra.mrb[0].mxu0 %v175
      %v308 = vpop.f32.mrb[0].mxu0
      %v309 = vadd.f32 0.0, %v308
      %v310 = vpop.f32.mrb[0].mxu0
      %v311 = vpop.f32.mrb[0].mxu0
      %v312 = vadd.f32 0.0, %v311
      %v313 = vpop.f32.mrb[0].mxu0
      %314 = vmatprep.mubr.bf16.mxu0 0
      %315 = vmatmul.mubr.bf16.gmra.mrb[0].mxu0 %v176
      %v316 = vpop.f32.mrb[0].mxu0
      %v317 = vadd.f32 0.0, %v316
      %v318 = vpop.f32.mrb[0].mxu0
      %v319 = vpop.f32.mrb[0].mxu0
      %v320 = vadd.f32 0.0, %v319
      %v321 = vpop.f32.mrb[0].mxu0
      %322 = vmatprep.mubr.bf16.mxu0 0
      %323 = vmatmul.mubr.bf16.gmra.mrb[0].mxu0 %v177
      %v324 = vpop.f32.mrb[0].mxu0
      %v325 = vadd.f32 0.0, %v324
      %v326 = vpop.f32.mrb[0].mxu0
      %v327 = vpop.f32.mrb[0].mxu0
      %v328 = vadd.f32 0.0, %v327
      %v329 = vpop.f32.mrb[0].mxu0
      %330 = vdwg.mxu0
      %v331 = vadd.f32 %v90, %v269
      %v332 = vadd.f32 %v91, %v272
      %v333 = vadd.f32 %v92, %v277
      %v334 = vadd.f32 %v93, %v280
      %v335 = vadd.f32 %v94, %v285
      %v336 = vadd.f32 %v95, %v288
      %v337 = vadd.f32 %v96, %v293
      %v338 = vadd.f32 %v97, %v296
      %v339 = vadd.f32 %v98, %v301
      %v340 = vadd.f32 %v99, %v304
      %v341 = vadd.f32 %v100, %v309
      %v342 = vadd.f32 %v101, %v312
      %v343 = vadd.f32 %v102, %v317
      %v344 = vadd.f32 %v103, %v320
      %v345 = vadd.f32 %v104, %v325
      %v346 = vadd.f32 %v105, %v328
      %347 = vst [vmem:[#allocation2] sm:$0xff] %v331
      %348 = vst [vmem:[#allocation2 + $0x8] sm:$0xff] %v332
      %349 = vst [vmem:[#allocation2 + $0x10] sm:$0xff] %v333
      %350 = vst [vmem:[#allocation2 + $0x18] sm:$0xff] %v334
      %351 = vst [vmem:[#allocation2 + $0x20] sm:$0xff] %v335
      %352 = vst [vmem:[#allocation2 + $0x28] sm:$0xff] %v336
      %353 = vst [vmem:[#allocation2 + $0x30] sm:$0xff] %v337
      %354 = vst [vmem:[#allocation2 + $0x38] sm:$0xff] %v338
      %355 = vst [vmem:[#allocation2 + $0x40] sm:$0xff] %v339
      %356 = vst [vmem:[#allocation2 + $0x48] sm:$0xff] %v340
      %357 = vst [vmem:[#allocation2 + $0x50] sm:$0xff] %v341
      %358 = vst [vmem:[#allocation2 + $0x58] sm:$0xff] %v342
      %359 = vst [vmem:[#allocation2 + $0x60] sm:$0xff] %v343
      %360 = vst [vmem:[#allocation2 + $0x68] sm:$0xff] %v344
      %361 = vst [vmem:[#allocation2 + $0x70] sm:$0xff] %v345
      %362 = vst [vmem:[#allocation2 + $0x78] sm:$0xff] %v346
    $region37: #{tpu_custom_call.1} parent=1 // pred_fallthru
      _
    // Predicated region
    $region38: #{tpu_custom_call.1} parent=1 // pred_check
      %p363 = pneg %p62
    $region39: #{tpu_custom_call.1} parent=1 // pred_check_branch
      %365 = sbr.rel (%p363) target = $region41
    $region40: #{tpu_custom_call.1} parent=1 // pred_region
      %v366 = vld [vmem:[#allocation2] sm:$0xff]
      %v367 = vld [vmem:[#allocation2 + $0x8] sm:$0xff]
      %v368 = vld [vmem:[#allocation2 + $0x10] sm:$0xff]
      %v369 = vld [vmem:[#allocation2 + $0x18] sm:$0xff]
      %v370 = vld [vmem:[#allocation2 + $0x20] sm:$0xff]
      %v371 = vld [vmem:[#allocation2 + $0x28] sm:$0xff]
      %v372 = vld [vmem:[#allocation2 + $0x30] sm:$0xff]
      %v373 = vld [vmem:[#allocation2 + $0x38] sm:$0xff]
      %v374 = vld [vmem:[#allocation2 + $0x40] sm:$0xff]
      %v375 = vld [vmem:[#allocation2 + $0x48] sm:$0xff]
      %v376 = vld [vmem:[#allocation2 + $0x50] sm:$0xff]
      %v377 = vld [vmem:[#allocation2 + $0x58] sm:$0xff]
      %v378 = vld [vmem:[#allocation2 + $0x60] sm:$0xff]
      %v379 = vld [vmem:[#allocation2 + $0x68] sm:$0xff]
      %v380 = vld [vmem:[#allocation2 + $0x70] sm:$0xff]
      %v381 = vld [vmem:[#allocation2 + $0x78] sm:$0xff]
      %v382 = vpack.c.bf16 %v367, %v366
      %v383 = vpack.c.bf16 %v369, %v368
      %v384 = vpack.c.bf16 %v371, %v370
      %v385 = vpack.c.bf16 %v373, %v372
      %v386 = vpack.c.bf16 %v375, %v374
      %v387 = vpack.c.bf16 %v377, %v376
      %v388 = vpack.c.bf16 %v379, %v378
      %v389 = vpack.c.bf16 %v381, %v380
      %v390 = vld [vmem:[#allocation10] sm:$0xf]
      %v391 = vld [vmem:[#allocation10 + $0x4] sm:$0xf]
      %v392 = vld [vmem:[#allocation10 + $0x8] sm:$0xf]
      %v393 = vld [vmem:[#allocation10 + $0xc] sm:$0xf]
      %v394 = vld [vmem:[#allocation10 + $0x10] sm:$0xf]
      %v395 = vld [vmem:[#allocation10 + $0x14] sm:$0xf]
      %v396 = vld [vmem:[#allocation10 + $0x18] sm:$0xf]
      %v397 = vld [vmem:[#allocation10 + $0x1c] sm:$0xf]
      %v398 = vld [vmem:[#allocation10 + $0x20] sm:$0xf]
      %v399 = vld [vmem:[#allocation10 + $0x24] sm:$0xf]
      %v400 = vld [vmem:[#allocation10 + $0x28] sm:$0xf]
      %v401 = vld [vmem:[#allocation10 + $0x2c] sm:$0xf]
      %v402 = vld [vmem:[#allocation10 + $0x30] sm:$0xf]
      %v403 = vld [vmem:[#allocation10 + $0x34] sm:$0xf]
      %v404 = vld [vmem:[#allocation10 + $0x38] sm:$0xf]
      %v405 = vld [vmem:[#allocation10 + $0x3c] sm:$0xf]
      %v406 = vld [vmem:[%s4] sm:$0x1]
      %v408 = vlaneseq
      %v409 = vshrl.u32 %v408, 7
      %v410 = vsub.s32 0, %v409
      %v411 = vrot.slane %v406, %v410
      %v429 = vunpack.c.l.b16 %v390
      %v430 = vunpack.c.l.b16 %v391
      %v431 = vunpack.c.l.b16 %v392
      %v432 = vunpack.c.l.b16 %v393
      %v433 = vunpack.c.l.b16 %v394
      %v434 = vunpack.c.l.b16 %v395
      %v435 = vunpack.c.l.b16 %v396
      %v436 = vunpack.c.l.b16 %v397
      %v437 = vunpack.c.l.b16 %v398
      %v438 = vunpack.c.l.b16 %v399
      %v439 = vunpack.c.l.b16 %v400
      %v440 = vunpack.c.l.b16 %v401
      %v441 = vunpack.c.l.b16 %v402
      %v442 = vunpack.c.l.b16 %v403
      %v443 = vunpack.c.l.b16 %v404
      %v444 = vunpack.c.l.b16 %v405
      %v445 = vpack.c.b16 %v430, %v429
      %v446 = vpack.c.b16 %v432, %v431
      %v447 = vpack.c.b16 %v434, %v433
      %v448 = vpack.c.b16 %v436, %v435
      %v449 = vpack.c.b16 %v438, %v437
      %v450 = vpack.c.b16 %v440, %v439
      %v451 = vpack.c.b16 %v442, %v441
      %v452 = vpack.c.b16 %v444, %v443
      %461 = vmatprep.subr.bf16.mxu0 0
      %462 = vmatpush1.bf16.msra.mxu0 %v445
      %463 = vmatprep.subr.bf16.mxu0 0
      %464 = vmatpush1.bf16.msra.mxu0 %v446
      %465 = vmatprep.subr.bf16.mxu0 0
      %466 = vmatpush1.bf16.msra.mxu0 %v447
      %467 = vmatprep.subr.bf16.mxu0 0
      %468 = vmatpush1.bf16.msra.mxu0 %v448
      %469 = vmatprep.subr.bf16.mxu0 0
      %470 = vmatpush1.bf16.msra.mxu0 %v449
      %471 = vmatprep.subr.bf16.mxu0 0
      %472 = vmatpush1.bf16.msra.mxu0 %v450
      %473 = vmatprep.subr.bf16.mxu0 0
      %474 = vmatpush1.bf16.msra.mxu0 %v451
      %475 = vmatprep.subr.bf16.mxu0 0
      %476 = vmatpush1.bf16.msra.mxu0 %v452
      %477 = vmatprep.subr.bf16.mxu0 0
      %478 = vmatpush1.bf16.msra.mxu0 0
      %479 = vmatprep.subr.bf16.mxu0 0
      %480 = vmatpush1.bf16.msra.mxu0 0
      %481 = vmatprep.subr.bf16.mxu0 0
      %482 = vmatpush1.bf16.msra.mxu0 0
      %483 = vmatprep.subr.bf16.mxu0 0
      %484 = vmatpush1.bf16.msra.mxu0 0
      %485 = vmatprep.subr.bf16.mxu0 0
      %486 = vmatpush1.bf16.msra.mxu0 0
      %487 = vmatprep.subr.bf16.mxu0 0
      %488 = vmatpush1.bf16.msra.mxu0 0
      %489 = vmatprep.subr.bf16.mxu0 0
      %490 = vmatpush1.bf16.msra.mxu0 0
      %491 = vmatprep.subr.bf16.mxu0 0
      %492 = vmatpush1.bf16.msra.mxu0 0
      %493 = vmatprep.mubr.bf16.mxu0 0
      %494 = vmatmul.mubr.bf16.gmra.mrb[0].mxu0 %v382
      %v495 = vpop.f32.mrb[0].mxu0
      %v496 = vadd.f32 %v411, %v495
      %v497 = vpop.f32.mrb[0].mxu0
      %v498 = vpop.f32.mrb[0].mxu0
      %v499 = vadd.f32 %v411, %v498
      %v500 = vpop.f32.mrb[0].mxu0
      %501 = vmatprep.mubr.bf16.mxu0 0
      %502 = vmatmul.mubr.bf16.gmra.mrb[0].mxu0 %v383
      %v503 = vpop.f32.mrb[0].mxu0
      %v504 = vadd.f32 %v411, %v503
      %v505 = vpop.f32.mrb[0].mxu0
      %v506 = vpop.f32.mrb[0].mxu0
      %v507 = vadd.f32 %v411, %v506
      %v508 = vpop.f32.mrb[0].mxu0
      %509 = vmatprep.mubr.bf16.mxu0 0
      %510 = vmatmul.mubr.bf16.gmra.mrb[0].mxu0 %v384
      %v511 = vpop.f32.mrb[0].mxu0
      %v512 = vadd.f32 %v411, %v511
      %v513 = vpop.f32.mrb[0].mxu0
      %v514 = vpop.f32.mrb[0].mxu0
      %v515 = vadd.f32 %v411, %v514
      %v516 = vpop.f32.mrb[0].mxu0
      %517 = vmatprep.mubr.bf16.mxu0 0
      %518 = vmatmul.mubr.bf16.gmra.mrb[0].mxu0 %v385
      %v519 = vpop.f32.mrb[0].mxu0
      %v520 = vadd.f32 %v411, %v519
      %v521 = vpop.f32.mrb[0].mxu0
      %v522 = vpop.f32.mrb[0].mxu0
      %v523 = vadd.f32 %v411, %v522
      %v524 = vpop.f32.mrb[0].mxu0
      %525 = vmatprep.mubr.bf16.mxu0 0
      %526 = vmatmul.mubr.bf16.gmra.mrb[0].mxu0 %v386
      %v527 = vpop.f32.mrb[0].mxu0
      %v528 = vadd.f32 %v411, %v527
      %v529 = vpop.f32.mrb[0].mxu0
      %v530 = vpop.f32.mrb[0].mxu0
      %v531 = vadd.f32 %v411, %v530
      %v532 = vpop.f32.mrb[0].mxu0
      %533 = vmatprep.mubr.bf16.mxu0 0
      %534 = vmatmul.mubr.bf16.gmra.mrb[0].mxu0 %v387
      %v535 = vpop.f32.mrb[0].mxu0
      %v536 = vadd.f32 %v411, %v535
      %v537 = vpop.f32.mrb[0].mxu0
      %v538 = vpop.f32.mrb[0].mxu0
      %v539 = vadd.f32 %v411, %v538
      %v540 = vpop.f32.mrb[0].mxu0
      %541 = vmatprep.mubr.bf16.mxu0 0
      %542 = vmatmul.mubr.bf16.gmra.mrb[0].mxu0 %v388
      %v543 = vpop.f32.mrb[0].mxu0
      %v544 = vadd.f32 %v411, %v543
      %v545 = vpop.f32.mrb[0].mxu0
      %v546 = vpop.f32.mrb[0].mxu0
      %v547 = vadd.f32 %v411, %v546
      %v548 = vpop.f32.mrb[0].mxu0
      %549 = vmatprep.mubr.bf16.mxu0 0
      %550 = vmatmul.mubr.bf16.gmra.mrb[0].mxu0 %v389
      %v551 = vpop.f32.mrb[0].mxu0
      %v552 = vadd.f32 %v411, %v551
      %v553 = vpop.f32.mrb[0].mxu0
      %v554 = vpop.f32.mrb[0].mxu0
      %v555 = vadd.f32 %v411, %v554
      %v556 = vpop.f32.mrb[0].mxu0
      %557 = vdwg.mxu0
      %v558 = vmax.f32 %v496, 0.0
      %v559 = vmax.f32 %v499, 0.0
      %v560 = vmax.f32 %v504, 0.0
      %v561 = vmax.f32 %v507, 0.0
      %v562 = vmax.f32 %v512, 0.0
      %v563 = vmax.f32 %v515, 0.0
      %v564 = vmax.f32 %v520, 0.0
      %v565 = vmax.f32 %v523, 0.0
      %v566 = vmax.f32 %v528, 0.0
      %v567 = vmax.f32 %v531, 0.0
      %v568 = vmax.f32 %v536, 0.0
      %v569 = vmax.f32 %v539, 0.0
      %v570 = vmax.f32 %v544, 0.0
      %v571 = vmax.f32 %v547, 0.0
      %v572 = vmax.f32 %v552, 0.0
      %v573 = vmax.f32 %v555, 0.0
      %v574 = vpack.c.bf16 %v559, %v558
      %v575 = vpack.c.bf16 %v561, %v560
      %v576 = vpack.c.bf16 %v563, %v562
      %v577 = vpack.c.bf16 %v565, %v564
      %v578 = vpack.c.bf16 %v567, %v566
      %v579 = vpack.c.bf16 %v569, %v568
      %v580 = vpack.c.bf16 %v571, %v570
      %v581 = vpack.c.bf16 %v573, %v572
      %v590 = vunpack.c.l.b16 %v574
      %v591 = vunpack.c.h.b16 %v574
      %v592 = vunpack.c.l.b16 %v575
      %v593 = vunpack.c.h.b16 %v575
      %v594 = vunpack.c.l.b16 %v576
      %v595 = vunpack.c.h.b16 %v576
      %v596 = vunpack.c.l.b16 %v577
      %v597 = vunpack.c.h.b16 %v577
      %v598 = vunpack.c.l.b16 %v578
      %v599 = vunpack.c.h.b16 %v578
      %v600 = vunpack.c.l.b16 %v579
      %v601 = vunpack.c.h.b16 %v579
      %v602 = vunpack.c.l.b16 %v580
      %v603 = vunpack.c.h.b16 %v580
      %v604 = vunpack.c.l.b16 %v581
      %v605 = vunpack.c.h.b16 %v581
      %v606 = vpack.c.b16 %v590, %v590
      %v607 = vpack.c.b16 %v591, %v591
      %v608 = vpack.c.b16 %v592, %v592
      %v609 = vpack.c.b16 %v593, %v593
      %v610 = vpack.c.b16 %v594, %v594
      %v611 = vpack.c.b16 %v595, %v595
      %v612 = vpack.c.b16 %v596, %v596
      %v613 = vpack.c.b16 %v597, %v597
      %v614 = vpack.c.b16 %v598, %v598
      %v615 = vpack.c.b16 %v599, %v599
      %v616 = vpack.c.b16 %v600, %v600
      %v617 = vpack.c.b16 %v601, %v601
      %v618 = vpack.c.b16 %v602, %v602
      %v619 = vpack.c.b16 %v603, %v603
      %v620 = vpack.c.b16 %v604, %v604
      %v621 = vpack.c.b16 %v605, %v605
      %638 = vst [vmem:[#allocation11] sm:$0xf] %v606
      %639 = vst [vmem:[#allocation11 + $0x4] sm:$0xf] %v607
      %640 = vst [vmem:[#allocation11 + $0x8] sm:$0xf] %v608
      %641 = vst [vmem:[#allocation11 + $0xc] sm:$0xf] %v609
      %642 = vst [vmem:[#allocation11 + $0x10] sm:$0xf] %v610
      %643 = vst [vmem:[#allocation11 + $0x14] sm:$0xf] %v611
      %644 = vst [vmem:[#allocation11 + $0x18] sm:$0xf] %v612
      %645 = vst [vmem:[#allocation11 + $0x1c] sm:$0xf] %v613
      %646 = vst [vmem:[#allocation11 + $0x20] sm:$0xf] %v614
      %647 = vst [vmem:[#allocation11 + $0x24] sm:$0xf] %v615
      %648 = vst [vmem:[#allocation11 + $0x28] sm:$0xf] %v616
      %649 = vst [vmem:[#allocation11 + $0x2c] sm:$0xf] %v617
      %650 = vst [vmem:[#allocation11 + $0x30] sm:$0xf] %v618
      %651 = vst [vmem:[#allocation11 + $0x34] sm:$0xf] %v619
      %652 = vst [vmem:[#allocation11 + $0x38] sm:$0xf] %v620
      %653 = vst [vmem:[#allocation11 + $0x3c] sm:$0xf] %v621
    $region41: #{tpu_custom_call.1} parent=1 // pred_fallthru
      _
    // Predicated region
    $region42: #{tpu_custom_call.1} parent=1 // pred_check
      _
    $region43: #{tpu_custom_call.1} parent=1 // pred_check_branch
      %655 = sbr.rel (0) target = $region45
    $region44: #{tpu_custom_call.1} parent=1 // pred_region
      %s657 = ssub.s32 1024, 1024
      %658 = vsyncadd [#allocation7], %s657
      %s659 = sshll.u32 [#allocation11], 4
      %s660 = int_to_ptr.vmem [resolvable:$true] %s659
      %665 = dma.vmem_to_hbm [thread:$0]  %s660, 1024, %s5, [#allocation7], 64, 64, 4
    $region45: #{tpu_custom_call.1} parent=1 // pred_fallthru
      _
    // Predicated region
    $region46: #{tpu_custom_call.1} parent=1 // pred_check
      _
    $region47: #{tpu_custom_call.1} parent=1 // pred_check_branch
      %667 = sbr.rel (0) target = $region49
    $region48: #{tpu_custom_call.1} parent=1 // pred_region
      %668 = dma.done [#allocation7], 1024
    $region49: #{tpu_custom_call.1} parent=1 // pred_fallthru
      _
    %669 = vsyncpa [#allocation6], 1
    %670 = vsyncpa [#allocation9], 1
    %671 = vsyncpa [#allocation7], 1

</llo_original>
